<compile_context>
chip_gen: v6e
topology: v6e:2x2x1
jax: 0.10.0
libtpu: 0.0.40
codegen_flags: <defaults>
</compile_context>

<pallas_src>
import numpy as np
import jax
import jax.numpy as jnp
from jax.experimental import pallas as pl
from jax.experimental.pallas import tpu as pltpu


# ----------------------------------- Pallas kernel ---------------------------------------

def cbam_kernel(x_ref, w1_ref, w2_ref, t_ref, o_ref):
    # x_ref:  (bt, C, HW)     lane-dense input block
    # w1_ref: (C, Cr)         mlp conv1 weight (transposed)
    # w2_ref: (Cr, C)         mlp conv2 weight (transposed)
    # t_ref:  (2*HW, HW)      whole 7x7 spatial conv folded into one matrix
    # o_ref:  (bt, C, HW)
    bt, c, hw = x_ref.shape
    inv_hw = 1.0 / float(hw)
    inv_c = 1.0 / float(c)

    xb = x_ref[...]                                   # (bt, C, HW) native dtype

    # ---------------- channel attention: global max/avg pool as lane-reduces ------------
    xf = xb.astype(jnp.float32)
    mx = jnp.max(xf, axis=-1)                         # (bt, C)
    av = jnp.sum(xf, axis=-1) * inv_hw                # (bt, C)

    pooled = jnp.concatenate([mx, av], axis=0)        # (2*bt, C)  stacked MLP input
    hid = jnp.maximum(
        jnp.dot(pooled, w1_ref[...], preferred_element_type=jnp.float32), 0.0)
    logits = jnp.dot(hid, w2_ref[...], preferred_element_type=jnp.float32)   # (2*bt, C)
    ch = jax.nn.sigmoid(logits[:bt] + logits[bt:])    # (bt, C)  channel gate

    # elementwise channel rescale in the input dtype (bf16 stays bf16 on v6e/v7x)
    x1 = xb * ch.astype(xb.dtype)[:, :, None]         # (bt, C, HW)

    # ---------------- spatial attention --------------------------------------------------
    x1f = x1.astype(jnp.float32)
    sm = jnp.max(x1f, axis=1)                         # (bt, HW)  max over channels
    sa = jnp.sum(x1f, axis=1) * inv_c                 # (bt, HW)  mean over channels
    maps = jnp.concatenate([sm, sa], axis=-1)         # (bt, 2*HW)  [max | avg]

    # 7x7 padded conv == ONE MXU matmul against the host-precomputed matrix T
    conv = jnp.dot(maps, t_ref[...], preferred_element_type=jnp.float32)      # (bt, HW)
    sp = jax.nn.sigmoid(conv)

    o_ref[...] = (x1 * sp.astype(x1.dtype)[:, None, :]).astype(o_ref.dtype)


# ----------------------------------- wrapper ----------------------------------------------

def _pick_batch_tile(n, c, hw, itemsize, budget_bytes, min_grid_steps):
    """Largest divisor of n whose block (in+out double-buffered + f32 working copies)
    fits the VMEM budget; optionally keep >= min_grid_steps steps (multi-TC chips)."""
    per_img = c * hw * (4 * itemsize + 2 * 4)          # 2x in + 2x out + ~2 f32 temps
    cap = max(1, budget_bytes // per_img)
    if min_grid_steps > 1 and n >= min_grid_steps:
        cap = min(cap, n // min_grid_steps)
    bt = 1
    for d in range(1, int(min(cap, n)) + 1):
        if n % d == 0:
            bt = d
    return bt


def cbam(x, w1, w2, conv_w):
    n, c, h, w = x.shape
    hw = h * w
    cr = w1.shape[1]
    kh = conv_w.shape[-1]
    pad = kh // 2
    assert conv_w.shape == (2, kh, kh)

    # ---- host-side: fold the whole (2 -> 1 channel, KxK, pad) conv into T (2*HW, HW) ----
    # conv_out[i, j] = sum_{ci,ky,kx} w[ci,ky,kx] * map_ci[i+ky-pad, j+kx-pad]  (zero pad)
    # => conv_flat = [sm_flat | sa_flat] @ T with
    #    T[ci*HW + r*W + s, i*W + j] = w[ci, r-i+pad, s-j+pad] when that index is valid.
    cw = np.asarray(conv_w, dtype=np.float32)
    t5 = np.zeros((2, h, w, h, w), np.float32)
    ii = np.arange(h)
    jj = np.arange(w)
    for ci in range(2):
        for ky in range(kh):
            r = ii + ky - pad
            mi = (r >= 0) & (r < h)
            for kx in range(kh):
                s = jj + kx - pad
                mj = (s >= 0) & (s < w)
                t5[ci, r[mi][:, None], s[mj][None, :],
                   ii[mi][:, None], jj[mj][None, :]] = cw[ci, ky, kx]
    t_mat = jnp.asarray(t5.reshape(2 * hw, hw))

    # ---- generation-aware VMEM budget & batch tile ---------------------------------------
    try:
        vmem_cap = int(pltpu.get_tpu_info().vmem_capacity_bytes)
    except Exception:
        vmem_cap = 64 * 1024 * 1024
    vmem_limit = max(16 * 1024 * 1024, min(vmem_cap * 3 // 4, 100 * 1024 * 1024))
    # 64-MiB-class chips (v7x, 2 TensorCores): keep >=4 grid steps so each core still
    # double-buffers; single-TC chips (v5e/v6e) get the biggest tile that fits.
    min_steps = 4 if vmem_cap <= 64 * 1024 * 1024 else 1
    const_bytes = 2 * 4 * (w1.size + w2.size + t_mat.size)   # double-buffered constants
    budget = max(1 << 20, vmem_limit - const_bytes - (2 << 20))
    bt = _pick_batch_tile(n, c, hw, x.dtype.itemsize, budget, min_steps)

    x_flat = x.reshape(n, c, hw)                      # lane-dense: HW on the lane axis

    out_flat = pl.pallas_call(
        cbam_kernel,
        out_shape=jax.ShapeDtypeStruct((n, c, hw), x.dtype),
        grid_spec=pltpu.PrefetchScalarGridSpec(
            num_scalar_prefetch=0,
            grid=(n // bt,),
            in_specs=[
                pl.BlockSpec((bt, c, hw), lambda g: (g, 0, 0)),
                pl.BlockSpec((c, cr), lambda g: (0, 0)),
                pl.BlockSpec((cr, c), lambda g: (0, 0)),
                pl.BlockSpec((2 * hw, hw), lambda g: (0, 0)),
            ],
            out_specs=pl.BlockSpec((bt, c, hw), lambda g: (g, 0, 0)),
        ),
        compiler_params=pltpu.CompilerParams(
            dimension_semantics=("parallel",),
            vmem_limit_bytes=vmem_limit,
        ),
    )(x_flat, w1, w2, t_mat)

    return out_flat.reshape(n, c, h, w)


# ----------------------------------- reference (pure JAX) ---------------------------------

def reference(x, w1, w2, conv_w):
    mx = jnp.max(x, axis=(2, 3))                      # (N, C)
    av = jnp.mean(x, axis=(2, 3))

    def mlp(v):
        return jnp.maximum(v @ w1, 0.0) @ w2

    ch = jax.nn.sigmoid(mlp(mx) + mlp(av))[:, :, None, None]
    x1 = x * ch
    sm = jnp.max(x1, axis=1, keepdims=True)
    sa = jnp.mean(x1, axis=1, keepdims=True)
    maps = jnp.concatenate([sm, sa], axis=1)          # (N, 2, H, W)
    pad = conv_w.shape[-1] // 2
    conv = jax.lax.conv_general_dilated(
        maps, conv_w[None], window_strides=(1, 1),
        padding=((pad, pad), (pad, pad)),
        dimension_numbers=("NCHW", "OIHW", "NCHW"))
    sp = jax.nn.sigmoid(conv)                         # (N, 1, H, W)
    return x1 * sp


# -------------------------------------- main ----------------------------------------------

if __name__ == "__main__":
    N, C, H, W = 2, 64, 16, 16
    reduction = 16
    spatial_kernel = 7
    Cr = C // reduction

    key = jax.random.PRNGKey(0)
    kx, k1, k2, k3 = jax.random.split(key, 4)
    x = jax.random.normal(kx, (N, C, H, W), dtype=jnp.float32)
    # nn.Conv2d(C, C//r, 1, bias=False) weight (Cr, C, 1, 1) -> stored transposed as (C, Cr)
    w1 = jax.random.normal(k1, (C, Cr), dtype=jnp.float32) * 0.1
    # nn.Conv2d(C//r, C, 1, bias=False) weight (C, Cr, 1, 1) -> stored transposed as (Cr, C)
    w2 = jax.random.normal(k2, (Cr, C), dtype=jnp.float32) * 0.1
    # nn.Conv2d(2, 1, 7, padding=3, bias=False) weight (1, 2, 7, 7) -> squeezed to (2, 7, 7)
    conv_w = jax.random.normal(k3, (2, spatial_kernel, spatial_kernel), dtype=jnp.float32) * 0.1

    out = jax.block_until_ready(cbam(x, w1, w2, conv_w))
    ref = jax.block_until_ready(reference(x, w1, w2, conv_w))

    assert out.shape == x.shape
    np.testing.assert_allclose(np.asarray(out), np.asarray(ref), rtol=1e-4, atol=1e-4)

    print("KERNEL_OK")
</pallas_src>

<mosaic_0001>
module attributes {stable_mosaic.version = 11 : i64} {
  func.func @cbam_kernel(%arg0: i32, %arg1: memref<2x64x256xf32, #tpu.memory_space<vmem>>, %arg2: memref<64x4xf32, #tpu.memory_space<vmem>>, %arg3: memref<4x64xf32, #tpu.memory_space<vmem>>, %arg4: memref<512x256xf32, #tpu.memory_space<vmem>>, %arg5: memref<2x64x256xf32, #tpu.memory_space<vmem>>) attributes {dimension_semantics = [#tpu.dimension_semantics<parallel>], iteration_bounds = array<i64: 1>, scalar_prefetch = 0 : i64, scratch_operands = 0 : i64, tpu.core_type = #tpu.core_type<tc>, window_params = [{transform_indices = @transform_0, window_bounds = array<i64: 2, 64, 256>}, {pipeline_mode = #tpu.pipeline_mode<synchronous>, transform_indices = @transform_1, window_bounds = array<i64: 64, 4>}, {pipeline_mode = #tpu.pipeline_mode<synchronous>, transform_indices = @transform_2, window_bounds = array<i64: 4, 64>}, {pipeline_mode = #tpu.pipeline_mode<synchronous>, transform_indices = @transform_3, window_bounds = array<i64: 512, 256>}, {transform_indices = @transform_4, window_bounds = array<i64: 2, 64, 256>}]} {
    %c0 = arith.constant 0 : index
    %c0_0 = arith.constant 0 : index
    %c0_1 = arith.constant 0 : index
    %0 = vector.load %arg1[%c0, %c0_0, %c0_1] : memref<2x64x256xf32, #tpu.memory_space<vmem>>, vector<2x64x256xf32>
    %cst = arith.constant dense<0xFF800000> : vector<2x64xf32>
    %1 = vector.multi_reduction <maximumf>, %0, %cst [2] : vector<2x64x256xf32> to vector<2x64xf32>
    %cst_2 = arith.constant dense<0.000000e+00> : vector<2x64xf32>
    %2 = vector.multi_reduction <add>, %0, %cst_2 [2] : vector<2x64x256xf32> to vector<2x64xf32>
    %cst_3 = arith.constant 3.906250e-03 : f32
    %3 = vector.broadcast %cst_3 : f32 to vector<2x64xf32>
    %4 = arith.mulf %2, %3 : vector<2x64xf32>
    %5 = tpu.concatenate %1, %4 in 0 : vector<2x64xf32>, vector<2x64xf32> -> vector<4x64xf32>
    %c0_4 = arith.constant 0 : index
    %c0_5 = arith.constant 0 : index
    %6 = vector.load %arg2[%c0_4, %c0_5] : memref<64x4xf32, #tpu.memory_space<vmem>>, vector<64x4xf32>
    %cst_6 = arith.constant dense<0.000000e+00> : vector<4x4xf32>
    %7 = tpu.matmul %5, %6, %cst_6 {dimension_numbers = #tpu.dot_dimension_numbers<[1], [0], [0], [1], [0, 0, 1, 1], [], []>} : vector<4x64xf32>, vector<64x4xf32>, vector<4x4xf32> -> vector<4x4xf32>
    %cst_7 = arith.constant 0.000000e+00 : f32
    %8 = vector.broadcast %cst_7 : f32 to vector<4x4xf32>
    %9 = arith.maximumf %7, %8 : vector<4x4xf32>
    %c0_8 = arith.constant 0 : index
    %c0_9 = arith.constant 0 : index
    %10 = vector.load %arg3[%c0_8, %c0_9] : memref<4x64xf32, #tpu.memory_space<vmem>>, vector<4x64xf32>
    %cst_10 = arith.constant dense<0.000000e+00> : vector<4x64xf32>
    %11 = tpu.matmul %9, %10, %cst_10 {dimension_numbers = #tpu.dot_dimension_numbers<[1], [0], [0], [1], [0, 0, 1, 1], [], []>} : vector<4x4xf32>, vector<4x64xf32>, vector<4x64xf32> -> vector<4x64xf32>
    %12 = vector.extract_strided_slice %11 {offsets = [0, 0], sizes = [2, 64], strides = [1, 1]} : vector<4x64xf32> to vector<2x64xf32>
    %13 = vector.extract_strided_slice %11 {offsets = [2, 0], sizes = [2, 64], strides = [1, 1]} : vector<4x64xf32> to vector<2x64xf32>
    %14 = arith.addf %12, %13 : vector<2x64xf32>
    %15 = arith.negf %14 : vector<2x64xf32>
    %16 = math.exp %15 : vector<2x64xf32>
    %cst_11 = arith.constant 1.000000e+00 : f32
    %17 = vector.broadcast %cst_11 : f32 to vector<2x64xf32>
    %18 = arith.addf %17, %16 : vector<2x64xf32>
    %19 = arith.divf %17, %18 : vector<2x64xf32>
    %20 = vector.shape_cast %19 : vector<2x64xf32> to vector<2x64x1xf32>
    %21 = vector.broadcast %20 : vector<2x64x1xf32> to vector<2x64x256xf32>
    %22 = arith.mulf %0, %21 : vector<2x64x256xf32>
    %cst_12 = arith.constant dense<0xFF800000> : vector<2x256xf32>
    %23 = vector.multi_reduction <maximumf>, %22, %cst_12 [1] : vector<2x64x256xf32> to vector<2x256xf32>
    %cst_13 = arith.constant dense<0.000000e+00> : vector<2x256xf32>
    %24 = vector.multi_reduction <add>, %22, %cst_13 [1] : vector<2x64x256xf32> to vector<2x256xf32>
    %cst_14 = arith.constant 1.562500e-02 : f32
    %25 = vector.broadcast %cst_14 : f32 to vector<2x256xf32>
    %26 = arith.mulf %24, %25 : vector<2x256xf32>
    %27 = tpu.concatenate %23, %26 in 1 : vector<2x256xf32>, vector<2x256xf32> -> vector<2x512xf32>
    %c0_15 = arith.constant 0 : index
    %c0_16 = arith.constant 0 : index
    %28 = vector.load %arg4[%c0_15, %c0_16] : memref<512x256xf32, #tpu.memory_space<vmem>>, vector<512x256xf32>
    %cst_17 = arith.constant dense<0.000000e+00> : vector<2x256xf32>
    %29 = tpu.matmul %27, %28, %cst_17 {dimension_numbers = #tpu.dot_dimension_numbers<[1], [0], [0], [1], [0, 0, 1, 1], [], []>} : vector<2x512xf32>, vector<512x256xf32>, vector<2x256xf32> -> vector<2x256xf32>
    %30 = arith.negf %29 : vector<2x256xf32>
    %31 = math.exp %30 : vector<2x256xf32>
    %cst_18 = arith.constant 1.000000e+00 : f32
    %32 = vector.broadcast %cst_18 : f32 to vector<2x256xf32>
    %33 = arith.addf %32, %31 : vector<2x256xf32>
    %34 = arith.divf %32, %33 : vector<2x256xf32>
    %35 = vector.shape_cast %34 : vector<2x256xf32> to vector<2x1x256xf32>
    %36 = vector.broadcast %35 : vector<2x1x256xf32> to vector<2x64x256xf32>
    %37 = arith.mulf %22, %36 : vector<2x64x256xf32>
    %c0_19 = arith.constant 0 : index
    %c0_20 = arith.constant 0 : index
    %c0_21 = arith.constant 0 : index
    %38 = vector.load %arg5[%c0_19, %c0_20, %c0_21] : memref<2x64x256xf32, #tpu.memory_space<vmem>>, vector<2x64x256xf32>
    tpu.vector_store %arg5[%c0_19, %c0_20, %c0_21], %37 {strides = array<i32>} : memref<2x64x256xf32, #tpu.memory_space<vmem>>, vector<2x64x256xf32>,
    return
  }
  func.func @transform_0(%arg0: i32) -> (i32, i32, i32) {
    %c0_i32 = arith.constant 0 : i32
    %c0_i32_0 = arith.constant 0 : i32
    %c0_i32_1 = arith.constant 0 : i32
    return %arg0, %c0_i32, %c0_i32_0 : i32, i32, i32
  }
  func.func @transform_1(%arg0: i32) -> (i32, i32) {
    %c0_i32 = arith.constant 0 : i32
    %c0_i32_0 = arith.constant 0 : i32
    %c0_i32_1 = arith.constant 0 : i32
    return %c0_i32, %c0_i32_0 : i32, i32
  }
  func.func @transform_2(%arg0: i32) -> (i32, i32) {
    %c0_i32 = arith.constant 0 : i32
    %c0_i32_0 = arith.constant 0 : i32
    %c0_i32_1 = arith.constant 0 : i32
    return %c0_i32, %c0_i32_0 : i32, i32
  }
  func.func @transform_3(%arg0: i32) -> (i32, i32) {
    %c0_i32 = arith.constant 0 : i32
    %c0_i32_0 = arith.constant 0 : i32
    %c0_i32_1 = arith.constant 0 : i32
    return %c0_i32, %c0_i32_0 : i32, i32
  }
  func.func @transform_4(%arg0: i32) -> (i32, i32, i32) {
    %c0_i32 = arith.constant 0 : i32
    %c0_i32_0 = arith.constant 0 : i32
    %c0_i32_1 = arith.constant 0 : i32
    return %arg0, %c0_i32, %c0_i32_0 : i32, i32, i32
  }
}

</mosaic_0001>

<llo_original>
// kernel: tpu_custom_call.1
$region0: #{tpu_custom_call.1}
  #allocation0 [shape = 'u32[]', space=smem, size = 0x4, offset = 0x4, fixed_abs, tag = 'smem constant byte address 0x4 - core index']
  #allocation1 [shape = 'u32[144,128]{1,0:T(1,128)}', space=vmem, size = 0x12000, scoped, tag = 'internal scratch']
  %s0 = inlined_call_operand.hbm [shape: f32[2,64,256], index: 0, kind: input, shape index: {}]
  %s1 = inlined_call_operand.vmem [shape: f32[64,4], index: 1, kind: input, shape index: {}]
  %s2 = inlined_call_operand.vmem [shape: f32[4,64], index: 2, kind: input, shape index: {}]
  %s3 = inlined_call_operand.hbm [shape: f32[512,256], index: 3, kind: input, shape index: {}]
  %s4 = inlined_call_operand.hbm [shape: f32[2,64,256], index: 4, kind: output, shape index: {}]
  %s5 = sld [smem:[#allocation0]]
  $region34: #{tpu_custom_call.1} parent=0
    _
  %s7 = ssub.s32 1, %s5
  %s8 = scalar_select 0, %s7, %s5
  $region1: #{tpu_custom_call.1} parent=0
    #allocation2 [shape = 'u8[131072]{0}', space=vmem, size = 0x20000, scoped, tag = 'input window, operand 0, single buffered']
    #allocation3 [shape = 's32[1]{0}', space=sflag, size = 0x4, scoped, tag = 'scoped memory for tpu_custom_call.1']
    #allocation4 [shape = 's32[1]{0}', space=sflag, size = 0x4, scoped, tag = 'scoped memory for tpu_custom_call.1']
    #allocation5 [shape = 'u8[524288]{0}', space=vmem, size = 0x80000, scoped, tag = 'input window, operand 3, single buffered']
    #allocation6 [shape = 's32[1]{0}', space=sflag, size = 0x4, scoped, tag = 'scoped memory for tpu_custom_call.1']
    #allocation7 [shape = 'u8[131072]{0}', space=vmem, size = 0x20000, scoped, tag = 'output window, operand 0, single buffered']
    %9 = vsyncpa [#allocation3], 0
    %10 = vsyncpa [#allocation6], 0
    %11 = vsyncpa [#allocation4], 0
    // Predicated region
    $region2: #{tpu_custom_call.1} parent=1 // pred_check
      _
    $region3: #{tpu_custom_call.1} parent=1 // pred_check_branch
      %13 = sbr.rel (0) target = $region5
    $region4: #{tpu_custom_call.1} parent=1 // pred_region
      %s15 = ssub.s32 4096, 4096
      %16 = vsyncadd [#allocation3], %s15
      %s17 = sshll.u32 [#allocation2], 4
      %s18 = int_to_ptr.vmem [resolvable:$true] %s17
      %23 = dma.hbm_to_vmem [thread:$0]  %s0, 4096, %s18, [#allocation3], 256, 256, 16
    $region5: #{tpu_custom_call.1} parent=1 // pred_fallthru
      _
    // Predicated region
    $region6: #{tpu_custom_call.1} parent=1 // pred_check
      _
    $region7: #{tpu_custom_call.1} parent=1 // pred_check_branch
      %25 = sbr.rel (0) target = $region9
    $region8: #{tpu_custom_call.1} parent=1 // pred_region
      _
    $region9: #{tpu_custom_call.1} parent=1 // pred_fallthru
      _
    // Predicated region
    $region10: #{tpu_custom_call.1} parent=1 // pred_check
      _
    $region11: #{tpu_custom_call.1} parent=1 // pred_check_branch
      %27 = sbr.rel (0) target = $region13
    $region12: #{tpu_custom_call.1} parent=1 // pred_region
      _
    $region13: #{tpu_custom_call.1} parent=1 // pred_fallthru
      _
    // Predicated region
    $region14: #{tpu_custom_call.1} parent=1 // pred_check
      _
    $region15: #{tpu_custom_call.1} parent=1 // pred_check_branch
      %29 = sbr.rel (0) target = $region17
    $region16: #{tpu_custom_call.1} parent=1 // pred_region
      %s31 = ssub.s32 16384, 16384
      %32 = vsyncadd [#allocation6], %s31
      %s33 = sshll.u32 [#allocation5], 4
      %s34 = int_to_ptr.vmem [resolvable:$true] %s33
      %39 = dma.hbm_to_vmem [thread:$0]  %s3, 16384, %s34, [#allocation6], 256, 256, 16
    $region17: #{tpu_custom_call.1} parent=1 // pred_fallthru
      _
    // Predicated region
    $region18: #{tpu_custom_call.1} parent=1 // pred_check
      _
    $region19: #{tpu_custom_call.1} parent=1 // pred_check_branch
      %41 = sbr.rel (0) target = $region21
    $region20: #{tpu_custom_call.1} parent=1 // pred_region
      %42 = dma.done [#allocation3], 4096
    $region21: #{tpu_custom_call.1} parent=1 // pred_fallthru
      _
    // Predicated region
    $region22: #{tpu_custom_call.1} parent=1 // pred_check
      _
    $region23: #{tpu_custom_call.1} parent=1 // pred_check_branch
      %44 = sbr.rel (0) target = $region25
    $region24: #{tpu_custom_call.1} parent=1 // pred_region
      %45 = dma.done [#allocation6], 16384
    $region25: #{tpu_custom_call.1} parent=1 // pred_fallthru
      _
    %v46 = vld [vmem:[#allocation2] sm:$0xff]
    %v47 = vld [vmem:[#allocation2 + $0x8] sm:$0xff]
    %v48 = vld [vmem:[#allocation2 + $0x10] sm:$0xff]
    %v49 = vld [vmem:[#allocation2 + $0x18] sm:$0xff]
    %v50 = vld [vmem:[#allocation2 + $0x20] sm:$0xff]
    %v51 = vld [vmem:[#allocation2 + $0x28] sm:$0xff]
    %v52 = vld [vmem:[#allocation2 + $0x30] sm:$0xff]
    %v53 = vld [vmem:[#allocation2 + $0x38] sm:$0xff]
    %v54 = vld [vmem:[#allocation2 + $0x40] sm:$0xff]
    %v55 = vld [vmem:[#allocation2 + $0x48] sm:$0xff]
    %v56 = vld [vmem:[#allocation2 + $0x50] sm:$0xff]
    %v57 = vld [vmem:[#allocation2 + $0x58] sm:$0xff]
    %v58 = vld [vmem:[#allocation2 + $0x60] sm:$0xff]
    %v59 = vld [vmem:[#allocation2 + $0x68] sm:$0xff]
    %v60 = vld [vmem:[#allocation2 + $0x70] sm:$0xff]
    %v61 = vld [vmem:[#allocation2 + $0x78] sm:$0xff]
    %v62 = vld [vmem:[#allocation2 + $0x80] sm:$0xff]
    %v63 = vld [vmem:[#allocation2 + $0x88] sm:$0xff]
    %v64 = vld [vmem:[#allocation2 + $0x90] sm:$0xff]
    %v65 = vld [vmem:[#allocation2 + $0x98] sm:$0xff]
    %v66 = vld [vmem:[#allocation2 + $0xa0] sm:$0xff]
    %v67 = vld [vmem:[#allocation2 + $0xa8] sm:$0xff]
    %v68 = vld [vmem:[#allocation2 + $0xb0] sm:$0xff]
    %v69 = vld [vmem:[#allocation2 + $0xb8] sm:$0xff]
    %v70 = vld [vmem:[#allocation2 + $0xc0] sm:$0xff]
    %v71 = vld [vmem:[#allocation2 + $0xc8] sm:$0xff]
    %v72 = vld [vmem:[#allocation2 + $0xd0] sm:$0xff]
    %v73 = vld [vmem:[#allocation2 + $0xd8] sm:$0xff]
    %v74 = vld [vmem:[#allocation2 + $0xe0] sm:$0xff]
    %v75 = vld [vmem:[#allocation2 + $0xe8] sm:$0xff]
    %v76 = vld [vmem:[#allocation2 + $0xf0] sm:$0xff]
    %v77 = vld [vmem:[#allocation2 + $0xf8] sm:$0xff]
    %v78 = vmax.f32 %v46, %v47
    %79 = vmax.xlane.f32.xlu0 %v78
    %v80 = vpop.xlane.xlu0 %79
    %v81 = vmax.f32 %v48, %v49
    %82 = vmax.xlane.f32.xlu0 %v81
    %v83 = vpop.xlane.xlu0 %82
    %v84 = vmax.f32 %v50, %v51
    %85 = vmax.xlane.f32.xlu0 %v84
    %v86 = vpop.xlane.xlu0 %85
    %v87 = vmax.f32 %v52, %v53
    %88 = vmax.xlane.f32.xlu0 %v87
    %v89 = vpop.xlane.xlu0 %88
    %v90 = vmax.f32 %v54, %v55
    %91 = vmax.xlane.f32.xlu0 %v90
    %v92 = vpop.xlane.xlu0 %91
    %v93 = vmax.f32 %v56, %v57
    %94 = vmax.xlane.f32.xlu0 %v93
    %v95 = vpop.xlane.xlu0 %94
    %v96 = vmax.f32 %v58, %v59
    %97 = vmax.xlane.f32.xlu0 %v96
    %v98 = vpop.xlane.xlu0 %97
    %v99 = vmax.f32 %v60, %v61
    %100 = vmax.xlane.f32.xlu0 %v99
    %v101 = vpop.xlane.xlu0 %100
    %v102 = vmax.f32 %v62, %v63
    %103 = vmax.xlane.f32.xlu0 %v102
    %v104 = vpop.xlane.xlu0 %103
    %v105 = vmax.f32 %v64, %v65
    %106 = vmax.xlane.f32.xlu0 %v105
    %v107 = vpop.xlane.xlu0 %106
    %v108 = vmax.f32 %v66, %v67
    %109 = vmax.xlane.f32.xlu0 %v108
    %v110 = vpop.xlane.xlu0 %109
    %v111 = vmax.f32 %v68, %v69
    %112 = vmax.xlane.f32.xlu0 %v111
    %v113 = vpop.xlane.xlu0 %112
    %v114 = vmax.f32 %v70, %v71
    %115 = vmax.xlane.f32.xlu0 %v114
    %v116 = vpop.xlane.xlu0 %115
    %v117 = vmax.f32 %v72, %v73
    %118 = vmax.xlane.f32.xlu0 %v117
    %v119 = vpop.xlane.xlu0 %118
    %v120 = vmax.f32 %v74, %v75
    %121 = vmax.xlane.f32.xlu0 %v120
    %v122 = vpop.xlane.xlu0 %121
    %v123 = vmax.f32 %v76, %v77
    %124 = vmax.xlane.f32.xlu0 %v123
    %v125 = vpop.xlane.xlu0 %124
    %v126 = vadd.f32 %v46, %v47
    %127 = vadd.xlane.f32.xlu0 %v126
    %v128 = vpop.xlane.xlu0 %127
    %v129 = vadd.f32 %v48, %v49
    %130 = vadd.xlane.f32.xlu0 %v129
    %v131 = vpop.xlane.xlu0 %130
    %v132 = vadd.f32 %v50, %v51
    %133 = vadd.xlane.f32.xlu0 %v132
    %v134 = vpop.xlane.xlu0 %133
    %v135 = vadd.f32 %v52, %v53
    %136 = vadd.xlane.f32.xlu0 %v135
    %v137 = vpop.xlane.xlu0 %136
    %v138 = vadd.f32 %v54, %v55
    %139 = vadd.xlane.f32.xlu0 %v138
    %v140 = vpop.xlane.xlu0 %139
    %v141 = vadd.f32 %v56, %v57
    %142 = vadd.xlane.f32.xlu0 %v141
    %v143 = vpop.xlane.xlu0 %142
    %v144 = vadd.f32 %v58, %v59
    %145 = vadd.xlane.f32.xlu0 %v144
    %v146 = vpop.xlane.xlu0 %145
    %v147 = vadd.f32 %v60, %v61
    %148 = vadd.xlane.f32.xlu0 %v147
    %v149 = vpop.xlane.xlu0 %148
    %v150 = vadd.f32 %v62, %v63
    %151 = vadd.xlane.f32.xlu0 %v150
    %v152 = vpop.xlane.xlu0 %151
    %v153 = vadd.f32 %v64, %v65
    %154 = vadd.xlane.f32.xlu0 %v153
    %v155 = vpop.xlane.xlu0 %154
    %v156 = vadd.f32 %v66, %v67
    %157 = vadd.xlane.f32.xlu0 %v156
    %v158 = vpop.xlane.xlu0 %157
    %v159 = vadd.f32 %v68, %v69
    %160 = vadd.xlane.f32.xlu0 %v159
    %v161 = vpop.xlane.xlu0 %160
    %v162 = vadd.f32 %v70, %v71
    %163 = vadd.xlane.f32.xlu0 %v162
    %v164 = vpop.xlane.xlu0 %163
    %v165 = vadd.f32 %v72, %v73
    %166 = vadd.xlane.f32.xlu0 %v165
    %v167 = vpop.xlane.xlu0 %166
    %v168 = vadd.f32 %v74, %v75
    %169 = vadd.xlane.f32.xlu0 %v168
    %v170 = vpop.xlane.xlu0 %169
    %v171 = vadd.f32 %v76, %v77
    %172 = vadd.xlane.f32.xlu0 %v171
    %v173 = vpop.xlane.xlu0 %172
    %v174 = vmul.f32 %v128, 0.00390625
    %v175 = vmul.f32 %v131, 0.00390625
    %v176 = vmul.f32 %v134, 0.00390625
    %v177 = vmul.f32 %v137, 0.00390625
    %v178 = vmul.f32 %v140, 0.00390625
    %v179 = vmul.f32 %v143, 0.00390625
    %v180 = vmul.f32 %v146, 0.00390625
    %v181 = vmul.f32 %v149, 0.00390625
    %v182 = vmul.f32 %v152, 0.00390625
    %v183 = vmul.f32 %v155, 0.00390625
    %v184 = vmul.f32 %v158, 0.00390625
    %v185 = vmul.f32 %v161, 0.00390625
    %v186 = vmul.f32 %v164, 0.00390625
    %v187 = vmul.f32 %v167, 0.00390625
    %v188 = vmul.f32 %v170, 0.00390625
    %v189 = vmul.f32 %v173, 0.00390625
    %v206 = vlaneseq
    %v207 = vand.u32 %v206, 127
    %v208 = vlaneseq
    %v209 = vshrl.u32 %v208, 7
    %v210 = vsub.s32 %v207, %v209
    %v211 = vrot.slane %v80, %v210
    %v212 = vadd.s32 %v207, 4294967288
    %v213 = vlaneseq
    %v214 = vshrl.u32 %v213, 7
    %v215 = vsub.s32 %v212, %v214
    %v216 = vrot.slane %v83, %v215
    %vm217 = vcmask 130112
    %v218 = vsel %vm217, %v216, %v211
    %v219 = vadd.s32 %v207, 4294967280
    %v220 = vlaneseq
    %v221 = vshrl.u32 %v220, 7
    %v222 = vsub.s32 %v219, %v221
    %v223 = vrot.slane %v86, %v222
    %vm224 = vcmask 195712
    %v225 = vsel %vm224, %v223, %v218
    %v226 = vadd.s32 %v207, 4294967272
    %v227 = vlaneseq
    %v228 = vshrl.u32 %v227, 7
    %v229 = vsub.s32 %v226, %v228
    %v230 = vrot.slane %v89, %v229
    %vm231 = vcmask 261312
    %v232 = vsel %vm231, %v230, %v225
    %v233 = vadd.s32 %v207, 4294967264
    %v234 = vlaneseq
    %v235 = vshrl.u32 %v234, 7
    %v236 = vsub.s32 %v233, %v235
    %v237 = vrot.slane %v92, %v236
    %vm238 = vcmask 326912
    %v239 = vsel %vm238, %v237, %v232
    %v240 = vadd.s32 %v207, 4294967256
    %v241 = vlaneseq
    %v242 = vshrl.u32 %v241, 7
    %v243 = vsub.s32 %v240, %v242
    %v244 = vrot.slane %v95, %v243
    %vm245 = vcmask 392512
    %v246 = vsel %vm245, %v244, %v239
    %v247 = vadd.s32 %v207, 4294967248
    %v248 = vlaneseq
    %v249 = vshrl.u32 %v248, 7
    %v250 = vsub.s32 %v247, %v249
    %v251 = vrot.slane %v98, %v250
    %vm252 = vcmask 458112
    %v253 = vsel %vm252, %v251, %v246
    %v254 = vadd.s32 %v207, 4294967240
    %v255 = vlaneseq
    %v256 = vshrl.u32 %v255, 7
    %v257 = vsub.s32 %v254, %v256
    %v258 = vrot.slane %v101, %v257
    %vm259 = vcmask 523712
    %v260 = vsel %vm259, %v258, %v253
    %v261 = vlaneseq
    %v262 = vshrl.u32 %v261, 7
    %v263 = vsub.s32 %v207, %v262
    %v264 = vrot.slane %v104, %v263
    %v265 = vlaneseq
    %v266 = vshrl.u32 %v265, 7
    %v267 = vsub.s32 %v212, %v266
    %v268 = vrot.slane %v107, %v267
    %v269 = vsel %vm217, %v268, %v264
    %v270 = vlaneseq
    %v271 = vshrl.u32 %v270, 7
    %v272 = vsub.s32 %v219, %v271
    %v273 = vrot.slane %v110, %v272
    %v274 = vsel %vm224, %v273, %v269
    %v275 = vlaneseq
    %v276 = vshrl.u32 %v275, 7
    %v277 = vsub.s32 %v226, %v276
    %v278 = vrot.slane %v113, %v277
    %v279 = vsel %vm231, %v278, %v274
    %v280 = vlaneseq
    %v281 = vshrl.u32 %v280, 7
    %v282 = vsub.s32 %v233, %v281
    %v283 = vrot.slane %v116, %v282
    %v284 = vsel %vm238, %v283, %v279
    %v285 = vlaneseq
    %v286 = vshrl.u32 %v285, 7
    %v287 = vsub.s32 %v240, %v286
    %v288 = vrot.slane %v119, %v287
    %v289 = vsel %vm245, %v288, %v284
    %v290 = vlaneseq
    %v291 = vshrl.u32 %v290, 7
    %v292 = vsub.s32 %v247, %v291
    %v293 = vrot.slane %v122, %v292
    %v294 = vsel %vm252, %v293, %v289
    %v295 = vlaneseq
    %v296 = vshrl.u32 %v295, 7
    %v297 = vsub.s32 %v254, %v296
    %v298 = vrot.slane %v125, %v297
    %v299 = vsel %vm259, %v298, %v294
    %vm300 = vcmask 1041409
    %v301 = vsel %vm300, %v299, %v260
    %v319 = vlaneseq
    %v320 = vshrl.u32 %v319, 7
    %v321 = vsub.s32 %v207, %v320
    %v322 = vrot.slane %v174, %v321
    %v323 = vlaneseq
    %v324 = vshrl.u32 %v323, 7
    %v325 = vsub.s32 %v212, %v324
    %v326 = vrot.slane %v175, %v325
    %v327 = vsel %vm217, %v326, %v322
    %v328 = vlaneseq
    %v329 = vshrl.u32 %v328, 7
    %v330 = vsub.s32 %v219, %v329
    %v331 = vrot.slane %v176, %v330
    %v332 = vsel %vm224, %v331, %v327
    %v333 = vlaneseq
    %v334 = vshrl.u32 %v333, 7
    %v335 = vsub.s32 %v226, %v334
    %v336 = vrot.slane %v177, %v335
    %v337 = vsel %vm231, %v336, %v332
    %v338 = vlaneseq
    %v339 = vshrl.u32 %v338, 7
    %v340 = vsub.s32 %v233, %v339
    %v341 = vrot.slane %v178, %v340
    %v342 = vsel %vm238, %v341, %v337
    %v343 = vlaneseq
    %v344 = vshrl.u32 %v343, 7
    %v345 = vsub.s32 %v240, %v344
    %v346 = vrot.slane %v179, %v345
    %v347 = vsel %vm245, %v346, %v342
    %v348 = vlaneseq
    %v349 = vshrl.u32 %v348, 7
    %v350 = vsub.s32 %v247, %v349
    %v351 = vrot.slane %v180, %v350
    %v352 = vsel %vm252, %v351, %v347
    %v353 = vlaneseq
    %v354 = vshrl.u32 %v353, 7
    %v355 = vsub.s32 %v254, %v354
    %v356 = vrot.slane %v181, %v355
    %v357 = vsel %vm259, %v356, %v352
    %v358 = vlaneseq
    %v359 = vshrl.u32 %v358, 7
    %v360 = vsub.s32 %v207, %v359
    %v361 = vrot.slane %v182, %v360
    %v362 = vlaneseq
    %v363 = vshrl.u32 %v362, 7
    %v364 = vsub.s32 %v212, %v363
    %v365 = vrot.slane %v183, %v364
    %v366 = vsel %vm217, %v365, %v361
    %v367 = vlaneseq
    %v368 = vshrl.u32 %v367, 7
    %v369 = vsub.s32 %v219, %v368
    %v370 = vrot.slane %v184, %v369
    %v371 = vsel %vm224, %v370, %v366
    %v372 = vlaneseq
    %v373 = vshrl.u32 %v372, 7
    %v374 = vsub.s32 %v226, %v373
    %v375 = vrot.slane %v185, %v374
    %v376 = vsel %vm231, %v375, %v371
    %v377 = vlaneseq
    %v378 = vshrl.u32 %v377, 7
    %v379 = vsub.s32 %v233, %v378
    %v380 = vrot.slane %v186, %v379
    %v381 = vsel %vm238, %v380, %v376
    %v382 = vlaneseq
    %v383 = vshrl.u32 %v382, 7
    %v384 = vsub.s32 %v240, %v383
    %v385 = vrot.slane %v187, %v384
    %v386 = vsel %vm245, %v385, %v381
    %v387 = vlaneseq
    %v388 = vshrl.u32 %v387, 7
    %v389 = vsub.s32 %v247, %v388
    %v390 = vrot.slane %v188, %v389
    %v391 = vsel %vm252, %v390, %v386
    %v392 = vlaneseq
    %v393 = vshrl.u32 %v392, 7
    %v394 = vsub.s32 %v254, %v393
    %v395 = vrot.slane %v189, %v394
    %v396 = vsel %vm259, %v395, %v391
    %vm397 = vcmask 1043459
    %v398 = vsel %vm397, %v396, %v357
    %vm400 = vcmask 1041408
    %v401 = vsel %vm400, %v301, %v398
    %v402 = vld [vmem:[%s1] sm:$0xff]
    %v403 = vld [vmem:[%s1 + $0x8] sm:$0xff]
    %v404 = vld [vmem:[%s1 + $0x10] sm:$0xff]
    %v405 = vld [vmem:[%s1 + $0x18] sm:$0xff]
    %v406 = vld [vmem:[%s1 + $0x20] sm:$0xff]
    %v407 = vld [vmem:[%s1 + $0x28] sm:$0xff]
    %v408 = vld [vmem:[%s1 + $0x30] sm:$0xff]
    %v409 = vld [vmem:[%s1 + $0x38] sm:$0xff]
    %vm410 = vcmask 523264
    %v412 = vsel %vm410, %v401, 0
    %414 = vmatprep.subr.mxu0 0.0
    %415 = vmatpush1.msra.mxu0 0.0
    %416 = vmatprep.subr.mxu0 0.0
    %417 = vmatpush1.msra.mxu0 0.0
    %418 = vmatprep.subr.mxu0 0.0
    %419 = vmatpush1.msra.mxu0 0.0
    %420 = vmatprep.subr.mxu0 0.0
    %421 = vmatpush1.msra.mxu0 0.0
    %422 = vmatprep.subr.mxu0 0.0
    %423 = vmatpush1.msra.mxu0 0.0
    %424 = vmatprep.subr.mxu0 0.0
    %425 = vmatpush1.msra.mxu0 0.0
    %426 = vmatprep.subr.mxu0 0.0
    %427 = vmatpush1.msra.mxu0 0.0
    %428 = vmatprep.subr.mxu0 0.0
    %429 = vmatpush1.msra.mxu0 0.0
    %430 = vmatprep.subr.mxu0 0.0
    %431 = vmatpush1.msra.mxu0 %v409
    %432 = vmatprep.subr.mxu0 0.0
    %433 = vmatpush1.msra.mxu0 %v408
    %434 = vmatprep.subr.mxu0 0.0
    %435 = vmatpush1.msra.mxu0 %v407
    %436 = vmatprep.subr.mxu0 0.0
    %437 = vmatpush1.msra.mxu0 %v406
    %438 = vmatprep.subr.mxu0 0.0
    %439 = vmatpush1.msra.mxu0 %v405
    %440 = vmatprep.subr.mxu0 0.0
    %441 = vmatpush1.msra.mxu0 %v404
    %442 = vmatprep.subr.mxu0 0.0
    %443 = vmatpush1.msra.mxu0 %v403
    %444 = vmatprep.subr.mxu0 0.0
    %445 = vmatpush1.msra.mxu0 %v402
    %446 = vmatprep.subr.mxu0 0.0
    %447 = vmatpush2.msra.mxu0 0.0
    %448 = vmatprep.subr.mxu0 0.0
    %449 = vmatpush2.msra.mxu0 0.0
    %450 = vmatprep.subr.mxu0 0.0
    %451 = vmatpush2.msra.mxu0 0.0
    %452 = vmatprep.subr.mxu0 0.0
    %453 = vmatpush2.msra.mxu0 0.0
    %454 = vmatprep.subr.mxu0 0.0
    %455 = vmatpush2.msra.mxu0 0.0
    %456 = vmatprep.subr.mxu0 0.0
    %457 = vmatpush2.msra.mxu0 0.0
    %458 = vmatprep.subr.mxu0 0.0
    %459 = vmatpush2.msra.mxu0 0.0
    %460 = vmatprep.subr.mxu0 0.0
    %461 = vmatpush2.msra.mxu0 0.0
    %462 = vmatprep.subr.mxu0 0.0
    %463 = vmatpush2.msra.mxu0 0.0
    %464 = vmatprep.subr.mxu0 0.0
    %465 = vmatpush2.msra.mxu0 0.0
    %466 = vmatprep.subr.mxu0 0.0
    %467 = vmatpush2.msra.mxu0 0.0
    %468 = vmatprep.subr.mxu0 0.0
    %469 = vmatpush2.msra.mxu0 0.0
    %470 = vmatprep.subr.mxu0 0.0
    %471 = vmatpush2.msra.mxu0 0.0
    %472 = vmatprep.subr.mxu0 0.0
    %473 = vmatpush2.msra.mxu0 0.0
    %474 = vmatprep.subr.mxu0 0.0
    %475 = vmatpush2.msra.mxu0 0.0
    %476 = vmatprep.subr.mxu0 0.0
    %477 = vmatpush2.msra.mxu0 0.0
    %478 = vmatprep.mubr.f32.mxu0 0.0
    %479 = vmatmul.mubr.f32.gmra.mxu0 %v412
    %v480 = vpop.f32.mrf.mxu0
    %v481 = vadd.f32 0.0, %v480
    %v482 = vpop.f32.mrf.mxu0
    %483 = vdwg.mxu0
    %v484 = vmax.f32 %v481, 0.0
    %v485 = vld [vmem:[%s2] sm:$0xf]
    %vm486 = vcmask 31744
    %v488 = vsel %vm486, %v484, 0
    %vm490 = vcmask 1043456
    %v492 = vsel %vm490, %v485, 0
    %494 = vmatprep.subr.mxu0 0.0
    %495 = vmatpush1.msra.mxu0 0.0
    %496 = vmatprep.subr.mxu0 0.0
    %497 = vmatpush1.msra.mxu0 0.0
    %498 = vmatprep.subr.mxu0 0.0
    %499 = vmatpush1.msra.mxu0 0.0
    %500 = vmatprep.subr.mxu0 0.0
    %501 = vmatpush1.msra.mxu0 0.0
    %502 = vmatprep.subr.mxu0 0.0
    %503 = vmatpush1.msra.mxu0 0.0
    %504 = vmatprep.subr.mxu0 0.0
    %505 = vmatpush1.msra.mxu0 0.0
    %506 = vmatprep.subr.mxu0 0.0
    %507 = vmatpush1.msra.mxu0 0.0
    %508 = vmatprep.subr.mxu0 0.0
    %509 = vmatpush1.msra.mxu0 0.0
    %510 = vmatprep.subr.mxu0 0.0
    %511 = vmatpush1.msra.mxu0 0.0
    %512 = vmatprep.subr.mxu0 0.0
    %513 = vmatpush1.msra.mxu0 0.0
    %514 = vmatprep.subr.mxu0 0.0
    %515 = vmatpush1.msra.mxu0 0.0
    %516 = vmatprep.subr.mxu0 0.0
    %517 = vmatpush1.msra.mxu0 0.0
    %518 = vmatprep.subr.mxu0 0.0
    %519 = vmatpush1.msra.mxu0 0.0
    %520 = vmatprep.subr.mxu0 0.0
    %521 = vmatpush1.msra.mxu0 0.0
    %522 = vmatprep.subr.mxu0 0.0
    %523 = vmatpush1.msra.mxu0 0.0
    %524 = vmatprep.subr.mxu0 0.0
    %525 = vmatpush1.msra.mxu0 %v492
    %526 = vmatprep.subr.mxu0 0.0
    %527 = vmatpush2.msra.mxu0 0.0
    %528 = vmatprep.subr.mxu0 0.0
    %529 = vmatpush2.msra.mxu0 0.0
    %530 = vmatprep.subr.mxu0 0.0
    %531 = vmatpush2.msra.mxu0 0.0
    %532 = vmatprep.subr.mxu0 0.0
    %533 = vmatpush2.msra.mxu0 0.0
    %534 = vmatprep.subr.mxu0 0.0
    %535 = vmatpush2.msra.mxu0 0.0
    %536 = vmatprep.subr.mxu0 0.0
    %537 = vmatpush2.msra.mxu0 0.0
    %538 = vmatprep.subr.mxu0 0.0
    %539 = vmatpush2.msra.mxu0 0.0
    %540 = vmatprep.subr.mxu0 0.0
    %541 = vmatpush2.msra.mxu0 0.0
    %542 = vmatprep.subr.mxu0 0.0
    %543 = vmatpush2.msra.mxu0 0.0
    %544 = vmatprep.subr.mxu0 0.0
    %545 = vmatpush2.msra.mxu0 0.0
    %546 = vmatprep.subr.mxu0 0.0
    %547 = vmatpush2.msra.mxu0 0.0
    %548 = vmatprep.subr.mxu0 0.0
    %549 = vmatpush2.msra.mxu0 0.0
    %550 = vmatprep.subr.mxu0 0.0
    %551 = vmatpush2.msra.mxu0 0.0
    %552 = vmatprep.subr.mxu0 0.0
    %553 = vmatpush2.msra.mxu0 0.0
    %554 = vmatprep.subr.mxu0 0.0
    %555 = vmatpush2.msra.mxu0 0.0
    %556 = vmatprep.subr.mxu0 0.0
    %557 = vmatpush2.msra.mxu0 0.0
    %558 = vmatprep.mubr.f32.mxu0 0.0
    %559 = vmatmul.mubr.f32.gmra.mxu0 %v488
    %v560 = vpop.f32.mrf.mxu0
    %v561 = vadd.f32 0.0, %v560
    %v562 = vpop.f32.mrf.mxu0
    %563 = vdwg.mxu0
    %v565 = vrot.slane %v561, 2
    %v567 = vadd.f32 %v561, %v565
    %v568 = vxor.u32 %v567, 2147483648
    %v569 = vmul.f32 %v568, 1.442695
    %v570 = vpow.pop %v569
    %v571 = vadd.f32 %v570, 1.0
    %v572 = vrcp.pop %v571
    %v573 = vmul.f32 1.0, %v572
    %v574 = vlaneseq
    %v575 = vshrl.u32 %v574, 7
    %v576 = vsub.s32 0, %v575
    %v577 = vrot.slane %v573, %v576
    %579 = vbcast.lane.b32.xlu0 %v577, 256
    %v580 = vpop.permute.xlu0 %579
    %s582 = sor.u32 256, 8
    %583 = vbcast.lane.b32.xlu0 %v577, %s582
    %v584 = vpop.permute.xlu0 %583
    %s586 = sor.u32 256, 16
    %587 = vbcast.lane.b32.xlu0 %v577, %s586
    %v588 = vpop.permute.xlu0 %587
    %s590 = sor.u32 256, 24
    %591 = vbcast.lane.b32.xlu0 %v577, %s590
    %v592 = vpop.permute.xlu0 %591
    %s594 = sor.u32 256, 32
    %595 = vbcast.lane.b32.xlu0 %v577, %s594
    %v596 = vpop.permute.xlu0 %595
    %s598 = sor.u32 256, 40
    %599 = vbcast.lane.b32.xlu0 %v577, %s598
    %v600 = vpop.permute.xlu0 %599
    %s602 = sor.u32 256, 48
    %603 = vbcast.lane.b32.xlu0 %v577, %s602
    %v604 = vpop.permute.xlu0 %603
    %s606 = sor.u32 256, 56
    %607 = vbcast.lane.b32.xlu0 %v577, %s606
    %v608 = vpop.permute.xlu0 %607
    %v609 = vlaneseq
    %v610 = vshrl.u32 %v609, 7
    %v611 = vsub.s32 1, %v610
    %v612 = vrot.slane %v573, %v611
    %614 = vbcast.lane.b32.xlu0 %v612, 256
    %v615 = vpop.permute.xlu0 %614
    %s617 = sor.u32 256, 8
    %618 = vbcast.lane.b32.xlu0 %v612, %s617
    %v619 = vpop.permute.xlu0 %618
    %s621 = sor.u32 256, 16
    %622 = vbcast.lane.b32.xlu0 %v612, %s621
    %v623 = vpop.permute.xlu0 %622
    %s625 = sor.u32 256, 24
    %626 = vbcast.lane.b32.xlu0 %v612, %s625
    %v627 = vpop.permute.xlu0 %626
    %s629 = sor.u32 256, 32
    %630 = vbcast.lane.b32.xlu0 %v612, %s629
    %v631 = vpop.permute.xlu0 %630
    %s633 = sor.u32 256, 40
    %634 = vbcast.lane.b32.xlu0 %v612, %s633
    %v635 = vpop.permute.xlu0 %634
    %s637 = sor.u32 256, 48
    %638 = vbcast.lane.b32.xlu0 %v612, %s637
    %v639 = vpop.permute.xlu0 %638
    %s641 = sor.u32 256, 56
    %642 = vbcast.lane.b32.xlu0 %v612, %s641
    %v643 = vpop.permute.xlu0 %642
    %v644 = vmul.f32 %v46, %v580
    %v645 = vmul.f32 %v47, %v580
    %v646 = vmul.f32 %v48, %v584
    %v647 = vmul.f32 %v49, %v584
    %v648 = vmul.f32 %v50, %v588
    %v649 = vmul.f32 %v51, %v588
    %v650 = vmul.f32 %v52, %v592
    %v651 = vmul.f32 %v53, %v592
    %v652 = vmul.f32 %v54, %v596
    %v653 = vmul.f32 %v55, %v596
    %v654 = vmul.f32 %v56, %v600
    %v655 = vmul.f32 %v57, %v600
    %v656 = vmul.f32 %v58, %v604
    %v657 = vmul.f32 %v59, %v604
    %v658 = vmul.f32 %v60, %v608
    %v659 = vmul.f32 %v61, %v608
    %v660 = vmul.f32 %v62, %v615
    %v661 = vmul.f32 %v63, %v615
    %v662 = vmul.f32 %v64, %v619
    %v663 = vmul.f32 %v65, %v619
    %v664 = vmul.f32 %v66, %v623
    %v665 = vmul.f32 %v67, %v623
    %v666 = vmul.f32 %v68, %v627
    %v667 = vmul.f32 %v69, %v627
    %v668 = vmul.f32 %v70, %v631
    %v669 = vmul.f32 %v71, %v631
    %v670 = vmul.f32 %v72, %v635
    %v671 = vmul.f32 %v73, %v635
    %v672 = vmul.f32 %v74, %v639
    %v673 = vmul.f32 %v75, %v639
    %v674 = vmul.f32 %v76, %v643
    %v675 = vmul.f32 %v77, %v643
    %v676 = vmax.f32 %v644, %v646
    %v677 = vmax.f32 %v676, %v648
    %v678 = vmax.f32 %v677, %v650
    %v679 = vmax.f32 %v678, %v652
    %v680 = vmax.f32 %v679, %v654
    %v681 = vmax.f32 %v680, %v656
    %v682 = vmax.f32 %v681, %v658
    %v683 = vrot.slane %v682, 4
    %v684 = vmax.f32 %v682, %v683
    %v685 = vrot.slane %v684, 2
    %v686 = vmax.f32 %v684, %v685
    %v687 = vrot.slane %v686, 1
    %v688 = vmax.f32 %v686, %v687
    %v689 = vmax.f32 %v645, %v647
    %v690 = vmax.f32 %v689, %v649
    %v691 = vmax.f32 %v690, %v651
    %v692 = vmax.f32 %v691, %v653
    %v693 = vmax.f32 %v692, %v655
    %v694 = vmax.f32 %v693, %v657
    %v695 = vmax.f32 %v694, %v659
    %v696 = vrot.slane %v695, 4
    %v697 = vmax.f32 %v695, %v696
    %v698 = vrot.slane %v697, 2
    %v699 = vmax.f32 %v697, %v698
    %v700 = vrot.slane %v699, 1
    %v701 = vmax.f32 %v699, %v700
    %v702 = vmax.f32 %v660, %v662
    %v703 = vmax.f32 %v702, %v664
    %v704 = vmax.f32 %v703, %v666
    %v705 = vmax.f32 %v704, %v668
    %v706 = vmax.f32 %v705, %v670
    %v707 = vmax.f32 %v706, %v672
    %v708 = vmax.f32 %v707, %v674
    %v709 = vrot.slane %v708, 4
    %v710 = vmax.f32 %v708, %v709
    %v711 = vrot.slane %v710, 2
    %v712 = vmax.f32 %v710, %v711
    %v713 = vrot.slane %v712, 1
    %v714 = vmax.f32 %v712, %v713
    %v715 = vmax.f32 %v661, %v663
    %v716 = vmax.f32 %v715, %v665
    %v717 = vmax.f32 %v716, %v667
    %v718 = vmax.f32 %v717, %v669
    %v719 = vmax.f32 %v718, %v671
    %v720 = vmax.f32 %v719, %v673
    %v721 = vmax.f32 %v720, %v675
    %v722 = vrot.slane %v721, 4
    %v723 = vmax.f32 %v721, %v722
    %v724 = vrot.slane %v723, 2
    %v725 = vmax.f32 %v723, %v724
    %v726 = vrot.slane %v725, 1
    %v727 = vmax.f32 %v725, %v726
    %v728 = vadd.f32 %v644, %v646
    %v729 = vadd.f32 %v728, %v648
    %v730 = vadd.f32 %v729, %v650
    %v731 = vadd.f32 %v730, %v652
    %v732 = vadd.f32 %v731, %v654
    %v733 = vadd.f32 %v732, %v656
    %v734 = vadd.f32 %v733, %v658
    %v735 = vrot.slane %v734, 4
    %v736 = vadd.f32 %v734, %v735
    %v737 = vrot.slane %v736, 2
    %v738 = vadd.f32 %v736, %v737
    %v739 = vrot.slane %v738, 1
    %v740 = vadd.f32 %v738, %v739
    %v741 = vadd.f32 %v645, %v647
    %v742 = vadd.f32 %v741, %v649
    %v743 = vadd.f32 %v742, %v651
    %v744 = vadd.f32 %v743, %v653
    %v745 = vadd.f32 %v744, %v655
    %v746 = vadd.f32 %v745, %v657
    %v747 = vadd.f32 %v746, %v659
    %v748 = vrot.slane %v747, 4
    %v749 = vadd.f32 %v747, %v748
    %v750 = vrot.slane %v749, 2
    %v751 = vadd.f32 %v749, %v750
    %v752 = vrot.slane %v751, 1
    %v753 = vadd.f32 %v751, %v752
    %v754 = vadd.f32 %v660, %v662
    %v755 = vadd.f32 %v754, %v664
    %v756 = vadd.f32 %v755, %v666
    %v757 = vadd.f32 %v756, %v668
    %v758 = vadd.f32 %v757, %v670
    %v759 = vadd.f32 %v758, %v672
    %v760 = vadd.f32 %v759, %v674
    %v761 = vrot.slane %v760, 4
    %v762 = vadd.f32 %v760, %v761
    %v763 = vrot.slane %v762, 2
    %v764 = vadd.f32 %v762, %v763
    %v765 = vrot.slane %v764, 1
    %v766 = vadd.f32 %v764, %v765
    %v767 = vadd.f32 %v661, %v663
    %v768 = vadd.f32 %v767, %v665
    %v769 = vadd.f32 %v768, %v667
    %v770 = vadd.f32 %v769, %v669
    %v771 = vadd.f32 %v770, %v671
    %v772 = vadd.f32 %v771, %v673
    %v773 = vadd.f32 %v772, %v675
    %v774 = vrot.slane %v773, 4
    %v775 = vadd.f32 %v773, %v774
    %v776 = vrot.slane %v775, 2
    %v777 = vadd.f32 %v775, %v776
    %v778 = vrot.slane %v777, 1
    %v779 = vadd.f32 %v777, %v778
    %v780 = vmul.f32 %v740, 0.015625
    %v781 = vmul.f32 %v753, 0.015625
    %v782 = vmul.f32 %v766, 0.015625
    %v783 = vmul.f32 %v779, 0.015625
    %v788 = vsel %vm300, %v714, %v688
    %v789 = vsel %vm300, %v727, %v701
    %v796 = vsel %vm300, %v782, %v780
    %v797 = vsel %vm300, %v783, %v781
    %v800 = vld [vmem:[#allocation5] sm:$0xff]
    %v801 = vld [vmem:[#allocation5 + $0x8] sm:$0xff]
    %v802 = vld [vmem:[#allocation5 + $0x10] sm:$0xff]
    %v803 = vld [vmem:[#allocation5 + $0x18] sm:$0xff]
    %v804 = vld [vmem:[#allocation5 + $0x20] sm:$0xff]
    %v805 = vld [vmem:[#allocation5 + $0x28] sm:$0xff]
    %v806 = vld [vmem:[#allocation5 + $0x30] sm:$0xff]
    %v807 = vld [vmem:[#allocation5 + $0x38] sm:$0xff]
    %v808 = vld [vmem:[#allocation5 + $0x40] sm:$0xff]
    %v809 = vld [vmem:[#allocation5 + $0x48] sm:$0xff]
    %v810 = vld [vmem:[#allocation5 + $0x50] sm:$0xff]
    %v811 = vld [vmem:[#allocation5 + $0x58] sm:$0xff]
    %v812 = vld [vmem:[#allocation5 + $0x60] sm:$0xff]
    %v813 = vld [vmem:[#allocation5 + $0x68] sm:$0xff]
    %v814 = vld [vmem:[#allocation5 + $0x70] sm:$0xff]
    %v815 = vld [vmem:[#allocation5 + $0x78] sm:$0xff]
    %v816 = vld [vmem:[#allocation5 + $0x80] sm:$0xff]
    %v817 = vld [vmem:[#allocation5 + $0x88] sm:$0xff]
    %v818 = vld [vmem:[#allocation5 + $0x90] sm:$0xff]
    %v819 = vld [vmem:[#allocation5 + $0x98] sm:$0xff]
    %v820 = vld [vmem:[#allocation5 + $0xa0] sm:$0xff]
    %v821 = vld [vmem:[#allocation5 + $0xa8] sm:$0xff]
    %v822 = vld [vmem:[#allocation5 + $0xb0] sm:$0xff]
    %v823 = vld [vmem:[#allocation5 + $0xb8] sm:$0xff]
    %v824 = vld [vmem:[#allocation5 + $0xc0] sm:$0xff]
    %v825 = vld [vmem:[#allocation5 + $0xc8] sm:$0xff]
    %v826 = vld [vmem:[#allocation5 + $0xd0] sm:$0xff]
    %v827 = vld [vmem:[#allocation5 + $0xd8] sm:$0xff]
    %v828 = vld [vmem:[#allocation5 + $0xe0] sm:$0xff]
    %v829 = vld [vmem:[#allocation5 + $0xe8] sm:$0xff]
    %v830 = vld [vmem:[#allocation5 + $0xf0] sm:$0xff]
    %v831 = vld [vmem:[#allocation5 + $0xf8] sm:$0xff]
    %v832 = vld [vmem:[#allocation5 + $0x100] sm:$0xff]
    %v833 = vld [vmem:[#allocation5 + $0x108] sm:$0xff]
    %v834 = vld [vmem:[#allocation5 + $0x110] sm:$0xff]
    %v835 = vld [vmem:[#allocation5 + $0x118] sm:$0xff]
    %v836 = vld [vmem:[#allocation5 + $0x120] sm:$0xff]
    %v837 = vld [vmem:[#allocation5 + $0x128] sm:$0xff]
    %v838 = vld [vmem:[#allocation5 + $0x130] sm:$0xff]
    %v839 = vld [vmem:[#allocation5 + $0x138] sm:$0xff]
    %v840 = vld [vmem:[#allocation5 + $0x140] sm:$0xff]
    %v841 = vld [vmem:[#allocation5 + $0x148] sm:$0xff]
    %v842 = vld [vmem:[#allocation5 + $0x150] sm:$0xff]
    %v843 = vld [vmem:[#allocation5 + $0x158] sm:$0xff]
    %v844 = vld [vmem:[#allocation5 + $0x160] sm:$0xff]
    %v845 = vld [vmem:[#allocation5 + $0x168] sm:$0xff]
    %v846 = vld [vmem:[#allocation5 + $0x170] sm:$0xff]
    %v847 = vld [vmem:[#allocation5 + $0x178] sm:$0xff]
    %v848 = vld [vmem:[#allocation5 + $0x180] sm:$0xff]
    %v849 = vld [vmem:[#allocation5 + $0x188] sm:$0xff]
    %v850 = vld [vmem:[#allocation5 + $0x190] sm:$0xff]
    %v851 = vld [vmem:[#allocation5 + $0x198] sm:$0xff]
    %v852 = vld [vmem:[#allocation5 + $0x1a0] sm:$0xff]
    %v853 = vld [vmem:[#allocation5 + $0x1a8] sm:$0xff]
    %v854 = vld [vmem:[#allocation5 + $0x1b0] sm:$0xff]
    %v855 = vld [vmem:[#allocation5 + $0x1b8] sm:$0xff]
    %v856 = vld [vmem:[#allocation5 + $0x1c0] sm:$0xff]
    %v857 = vld [vmem:[#allocation5 + $0x1c8] sm:$0xff]
    %v858 = vld [vmem:[#allocation5 + $0x1d0] sm:$0xff]
    %v859 = vld [vmem:[#allocation5 + $0x1d8] sm:$0xff]
    %v860 = vld [vmem:[#allocation5 + $0x1e0] sm:$0xff]
    %v861 = vld [vmem:[#allocation5 + $0x1e8] sm:$0xff]
    %v862 = vld [vmem:[#allocation5 + $0x1f0] sm:$0xff]
    %v863 = vld [vmem:[#allocation5 + $0x1f8] sm:$0xff]
    %v864 = vld [vmem:[#allocation5 + $0x200] sm:$0xff]
    %v865 = vld [vmem:[#allocation5 + $0x208] sm:$0xff]
    %v866 = vld [vmem:[#allocation5 + $0x210] sm:$0xff]
    %v867 = vld [vmem:[#allocation5 + $0x218] sm:$0xff]
    %v868 = vld [vmem:[#allocation5 + $0x220] sm:$0xff]
    %v869 = vld [vmem:[#allocation5 + $0x228] sm:$0xff]
    %v870 = vld [vmem:[#allocation5 + $0x230] sm:$0xff]
    %v871 = vld [vmem:[#allocation5 + $0x238] sm:$0xff]
    %v872 = vld [vmem:[#allocation5 + $0x240] sm:$0xff]
    %v873 = vld [vmem:[#allocation5 + $0x248] sm:$0xff]
    %v874 = vld [vmem:[#allocation5 + $0x250] sm:$0xff]
    %v875 = vld [vmem:[#allocation5 + $0x258] sm:$0xff]
    %v876 = vld [vmem:[#allocation5 + $0x260] sm:$0xff]
    %v877 = vld [vmem:[#allocation5 + $0x268] sm:$0xff]
    %v878 = vld [vmem:[#allocation5 + $0x270] sm:$0xff]
    %v879 = vld [vmem:[#allocation5 + $0x278] sm:$0xff]
    %v880 = vld [vmem:[#allocation5 + $0x280] sm:$0xff]
    %v881 = vld [vmem:[#allocation5 + $0x288] sm:$0xff]
    %v882 = vld [vmem:[#allocation5 + $0x290] sm:$0xff]
    %v883 = vld [vmem:[#allocation5 + $0x298] sm:$0xff]
    %v884 = vld [vmem:[#allocation5 + $0x2a0] sm:$0xff]
    %v885 = vld [vmem:[#allocation5 + $0x2a8] sm:$0xff]
    %v886 = vld [vmem:[#allocation5 + $0x2b0] sm:$0xff]
    %v887 = vld [vmem:[#allocation5 + $0x2b8] sm:$0xff]
    %v888 = vld [vmem:[#allocation5 + $0x2c0] sm:$0xff]
    %v889 = vld [vmem:[#allocation5 + $0x2c8] sm:$0xff]
    %v890 = vld [vmem:[#allocation5 + $0x2d0] sm:$0xff]
    %v891 = vld [vmem:[#allocation5 + $0x2d8] sm:$0xff]
    %v892 = vld [vmem:[#allocation5 + $0x2e0] sm:$0xff]
    %v893 = vld [vmem:[#allocation5 + $0x2e8] sm:$0xff]
    %v894 = vld [vmem:[#allocation5 + $0x2f0] sm:$0xff]
    %v895 = vld [vmem:[#allocation5 + $0x2f8] sm:$0xff]
    %v896 = vld [vmem:[#allocation5 + $0x300] sm:$0xff]
    %v897 = vld [vmem:[#allocation5 + $0x308] sm:$0xff]
    %v898 = vld [vmem:[#allocation5 + $0x310] sm:$0xff]
    %v899 = vld [vmem:[#allocation5 + $0x318] sm:$0xff]
    %v900 = vld [vmem:[#allocation5 + $0x320] sm:$0xff]
    %v901 = vld [vmem:[#allocation5 + $0x328] sm:$0xff]
    %v902 = vld [vmem:[#allocation5 + $0x330] sm:$0xff]
    %v903 = vld [vmem:[#allocation5 + $0x338] sm:$0xff]
    %v904 = vld [vmem:[#allocation5 + $0x340] sm:$0xff]
    %v905 = vld [vmem:[#allocation5 + $0x348] sm:$0xff]
    %v906 = vld [vmem:[#allocation5 + $0x350] sm:$0xff]
    %v907 = vld [vmem:[#allocation5 + $0x358] sm:$0xff]
    %v908 = vld [vmem:[#allocation5 + $0x360] sm:$0xff]
    %v909 = vld [vmem:[#allocation5 + $0x368] sm:$0xff]
    %v910 = vld [vmem:[#allocation5 + $0x370] sm:$0xff]
    %v911 = vld [vmem:[#allocation5 + $0x378] sm:$0xff]
    %v912 = vld [vmem:[#allocation5 + $0x380] sm:$0xff]
    %v913 = vld [vmem:[#allocation5 + $0x388] sm:$0xff]
    %v914 = vld [vmem:[#allocation5 + $0x390] sm:$0xff]
    %v915 = vld [vmem:[#allocation5 + $0x398] sm:$0xff]
    %v916 = vld [vmem:[#allocation5 + $0x3a0] sm:$0xff]
    %v917 = vld [vmem:[#allocation5 + $0x3a8] sm:$0xff]
    %v918 = vld [vmem:[#allocation5 + $0x3b0] sm:$0xff]
    %v919 = vld [vmem:[#allocation5 + $0x3b8] sm:$0xff]
    %v920 = vld [vmem:[#allocation5 + $0x3c0] sm:$0xff]
    %v921 = vld [vmem:[#allocation5 + $0x3c8] sm:$0xff]
    %v922 = vld [vmem:[#allocation5 + $0x3d0] sm:$0xff]
    %v923 = vld [vmem:[#allocation5 + $0x3d8] sm:$0xff]
    %v924 = vld [vmem:[#allocation5 + $0x3e0] sm:$0xff]
    %v925 = vld [vmem:[#allocation5 + $0x3e8] sm:$0xff]
    %v926 = vld [vmem:[#allocation5 + $0x3f0] sm:$0xff]
    %v927 = vld [vmem:[#allocation5 + $0x3f8] sm:$0xff]
    %928 = vmatprep.subr.mxu0 %v831
    %929 = vmatpush1.msra.mxu0 %v830
    %930 = vmatprep.subr.mxu0 %v829
    %931 = vmatpush1.msra.mxu0 %v828
    %932 = vmatprep.subr.mxu0 %v827
    %933 = vmatpush1.msra.mxu0 %v826
    %934 = vmatprep.subr.mxu0 %v825
    %935 = vmatpush1.msra.mxu0 %v824
    %936 = vmatprep.subr.mxu0 %v823
    %937 = vmatpush1.msra.mxu0 %v822
    %938 = vmatprep.subr.mxu0 %v821
    %939 = vmatpush1.msra.mxu0 %v820
    %940 = vmatprep.subr.mxu0 %v819
    %941 = vmatpush1.msra.mxu0 %v818
    %942 = vmatprep.subr.mxu0 %v817
    %943 = vmatpush1.msra.mxu0 %v816
    %944 = vmatprep.subr.mxu0 %v815
    %945 = vmatpush1.msra.mxu0 %v814
    %946 = vmatprep.subr.mxu0 %v813
    %947 = vmatpush1.msra.mxu0 %v812
    %948 = vmatprep.subr.mxu0 %v811
    %949 = vmatpush1.msra.mxu0 %v810
    %950 = vmatprep.subr.mxu0 %v809
    %951 = vmatpush1.msra.mxu0 %v808
    %952 = vmatprep.subr.mxu0 %v807
    %953 = vmatpush1.msra.mxu0 %v806
    %954 = vmatprep.subr.mxu0 %v805
    %955 = vmatpush1.msra.mxu0 %v804
    %956 = vmatprep.subr.mxu0 %v803
    %957 = vmatpush1.msra.mxu0 %v802
    %958 = vmatprep.subr.mxu0 %v801
    %959 = vmatpush1.msra.mxu0 %v800
    %960 = vmatprep.subr.mxu0 %v863
    %961 = vmatpush2.msra.mxu0 %v862
    %962 = vmatprep.subr.mxu0 %v861
    %963 = vmatpush2.msra.mxu0 %v860
    %964 = vmatprep.subr.mxu0 %v859
    %965 = vmatpush2.msra.mxu0 %v858
    %966 = vmatprep.subr.mxu0 %v857
    %967 = vmatpush2.msra.mxu0 %v856
    %968 = vmatprep.subr.mxu0 %v855
    %969 = vmatpush2.msra.mxu0 %v854
    %970 = vmatprep.subr.mxu0 %v853
    %971 = vmatpush2.msra.mxu0 %v852
    %972 = vmatprep.subr.mxu0 %v851
    %973 = vmatpush2.msra.mxu0 %v850
    %974 = vmatprep.subr.mxu0 %v849
    %975 = vmatpush2.msra.mxu0 %v848
    %976 = vmatprep.subr.mxu0 %v847
    %977 = vmatpush2.msra.mxu0 %v846
    %978 = vmatprep.subr.mxu0 %v845
    %979 = vmatpush2.msra.mxu0 %v844
    %980 = vmatprep.subr.mxu0 %v843
    %981 = vmatpush2.msra.mxu0 %v842
    %982 = vmatprep.subr.mxu0 %v841
    %983 = vmatpush2.msra.mxu0 %v840
    %984 = vmatprep.subr.mxu0 %v839
    %985 = vmatpush2.msra.mxu0 %v838
    %986 = vmatprep.subr.mxu0 %v837
    %987 = vmatpush2.msra.mxu0 %v836
    %988 = vmatprep.subr.mxu0 %v835
    %989 = vmatpush2.msra.mxu0 %v834
    %990 = vmatprep.subr.mxu0 %v833
    %991 = vmatpush2.msra.mxu0 %v832
    %992 = vmatprep.mubr.f32.mxu0 %v789
    %993 = vmatmul.mubr.f32.gmra.mxu0 %v788
    %v994 = vpop.f32.mrf.mxu0
    %v995 = vadd.f32 0.0, %v994
    %v996 = vpop.f32.mrf.mxu0
    %v997 = vadd.f32 0.0, %v996
    %998 = vdwg.mxu0
    %999 = vmatprep.subr.mxu0 %v895
    %1000 = vmatpush1.msra.mxu0 %v894
    %1001 = vmatprep.subr.mxu0 %v893
    %1002 = vmatpush1.msra.mxu0 %v892
    %1003 = vmatprep.subr.mxu0 %v891
    %1004 = vmatpush1.msra.mxu0 %v890
    %1005 = vmatprep.subr.mxu0 %v889
    %1006 = vmatpush1.msra.mxu0 %v888
    %1007 = vmatprep.subr.mxu0 %v887
    %1008 = vmatpush1.msra.mxu0 %v886
    %1009 = vmatprep.subr.mxu0 %v885
    %1010 = vmatpush1.msra.mxu0 %v884
    %1011 = vmatprep.subr.mxu0 %v883
    %1012 = vmatpush1.msra.mxu0 %v882
    %1013 = vmatprep.subr.mxu0 %v881
    %1014 = vmatpush1.msra.mxu0 %v880
    %1015 = vmatprep.subr.mxu0 %v879
    %1016 = vmatpush1.msra.mxu0 %v878
    %1017 = vmatprep.subr.mxu0 %v877
    %1018 = vmatpush1.msra.mxu0 %v876
    %1019 = vmatprep.subr.mxu0 %v875
    %1020 = vmatpush1.msra.mxu0 %v874
    %1021 = vmatprep.subr.mxu0 %v873
    %1022 = vmatpush1.msra.mxu0 %v872
    %1023 = vmatprep.subr.mxu0 %v871
    %1024 = vmatpush1.msra.mxu0 %v870
    %1025 = vmatprep.subr.mxu0 %v869
    %1026 = vmatpush1.msra.mxu0 %v868
    %1027 = vmatprep.subr.mxu0 %v867
    %1028 = vmatpush1.msra.mxu0 %v866
    %1029 = vmatprep.subr.mxu0 %v865
    %1030 = vmatpush1.msra.mxu0 %v864
    %1031 = vmatprep.subr.mxu0 %v927
    %1032 = vmatpush2.msra.mxu0 %v926
    %1033 = vmatprep.subr.mxu0 %v925
    %1034 = vmatpush2.msra.mxu0 %v924
    %1035 = vmatprep.subr.mxu0 %v923
    %1036 = vmatpush2.msra.mxu0 %v922
    %1037 = vmatprep.subr.mxu0 %v921
    %1038 = vmatpush2.msra.mxu0 %v920
    %1039 = vmatprep.subr.mxu0 %v919
    %1040 = vmatpush2.msra.mxu0 %v918
    %1041 = vmatprep.subr.mxu0 %v917
    %1042 = vmatpush2.msra.mxu0 %v916
    %1043 = vmatprep.subr.mxu0 %v915
    %1044 = vmatpush2.msra.mxu0 %v914
    %1045 = vmatprep.subr.mxu0 %v913
    %1046 = vmatpush2.msra.mxu0 %v912
    %1047 = vmatprep.subr.mxu0 %v911
    %1048 = vmatpush2.msra.mxu0 %v910
    %1049 = vmatprep.subr.mxu0 %v909
    %1050 = vmatpush2.msra.mxu0 %v908
    %1051 = vmatprep.subr.mxu0 %v907
    %1052 = vmatpush2.msra.mxu0 %v906
    %1053 = vmatprep.subr.mxu0 %v905
    %1054 = vmatpush2.msra.mxu0 %v904
    %1055 = vmatprep.subr.mxu0 %v903
    %1056 = vmatpush2.msra.mxu0 %v902
    %1057 = vmatprep.subr.mxu0 %v901
    %1058 = vmatpush2.msra.mxu0 %v900
    %1059 = vmatprep.subr.mxu0 %v899
    %1060 = vmatpush2.msra.mxu0 %v898
    %1061 = vmatprep.subr.mxu0 %v897
    %1062 = vmatpush2.msra.mxu0 %v896
    %1063 = vmatprep.mubr.f32.mxu0 %v797
    %1064 = vmatmul.mubr.f32.gmra.mxu0 %v796
    %v1065 = vpop.f32.mrf.mxu0
    %v1066 = vadd.f32 %v995, %v1065
    %v1067 = vpop.f32.mrf.mxu0
    %v1068 = vadd.f32 %v997, %v1067
    %1069 = vdwg.mxu0
    %v1070 = vxor.u32 %v1066, 2147483648
    %v1071 = vxor.u32 %v1068, 2147483648
    %v1072 = vmul.f32 %v1070, 1.442695
    %v1073 = vpow.pop %v1072
    %v1074 = vmul.f32 %v1071, 1.442695
    %v1075 = vpow.pop %v1074
    %v1076 = vadd.f32 %v1073, 1.0
    %v1077 = vadd.f32 %v1075, 1.0
    %v1078 = vrcp.pop %v1076
    %v1079 = vmul.f32 1.0, %v1078
    %v1080 = vrcp.pop %v1077
    %v1081 = vmul.f32 1.0, %v1080
    %v1084 = vcombine.low %v1079, %v1081
    %v1086 = vunpack.c.l.s4 1966171168
    %v1087 = vunpack.c.0.s8 %v1086
    %v1088 = vlaneseq
    %v1089 = vshrl.u32 %v1088, 7
    %v1090 = vsub.s32 %v1087, %v1089
    %v1091 = vrot.slane %v1084, %v1090
    %v1092 = vcombine.high %v1091, %v1091
    %v1094 = vunpack.c.l.s4 1966171168
    %v1095 = vunpack.c.0.s8 %v1094
    %v1096 = vlaneseq
    %v1097 = vshrl.u32 %v1096, 7
    %v1098 = vsub.s32 %v1095, %v1097
    %v1099 = vrot.slane %v1091, %v1098
    %v1101 = vunpack.c.l.s4 1966171168
    %v1102 = vunpack.c.0.s8 %v1101
    %v1103 = vlaneseq
    %v1104 = vshrl.u32 %v1103, 7
    %v1105 = vsub.s32 %v1102, %v1104
    %v1106 = vrot.slane %v1092, %v1105
    %v1107 = vlaneseq
    %v1108 = vshrl.u32 %v1107, 7
    %v1109 = vsub.s32 0, %v1108
    %v1110 = vrot.slane %v1099, %v1109
    %v1111 = vlaneseq
    %v1112 = vshrl.u32 %v1111, 7
    %v1113 = vsub.s32 1, %v1112
    %v1114 = vrot.slane %v1099, %v1113
    %v1115 = vlaneseq
    %v1116 = vshrl.u32 %v1115, 7
    %v1117 = vsub.s32 0, %v1116
    %v1118 = vrot.slane %v1106, %v1117
    %v1119 = vlaneseq
    %v1120 = vshrl.u32 %v1119, 7
    %v1121 = vsub.s32 1, %v1120
    %v1122 = vrot.slane %v1106, %v1121
    %v1127 = vmul.f32 %v644, %v1110
    %v1128 = vmul.f32 %v645, %v1114
    %v1129 = vmul.f32 %v646, %v1110
    %v1130 = vmul.f32 %v647, %v1114
    %v1131 = vmul.f32 %v648, %v1110
    %v1132 = vmul.f32 %v649, %v1114
    %v1133 = vmul.f32 %v650, %v1110
    %v1134 = vmul.f32 %v651, %v1114
    %v1135 = vmul.f32 %v652, %v1110
    %v1136 = vmul.f32 %v653, %v1114
    %v1137 = vmul.f32 %v654, %v1110
    %v1138 = vmul.f32 %v655, %v1114
    %v1139 = vmul.f32 %v656, %v1110
    %v1140 = vmul.f32 %v657, %v1114
    %v1141 = vmul.f32 %v658, %v1110
    %v1142 = vmul.f32 %v659, %v1114
    %v1143 = vmul.f32 %v660, %v1118
    %v1144 = vmul.f32 %v661, %v1122
    %v1145 = vmul.f32 %v662, %v1118
    %v1146 = vmul.f32 %v663, %v1122
    %v1147 = vmul.f32 %v664, %v1118
    %v1148 = vmul.f32 %v665, %v1122
    %v1149 = vmul.f32 %v666, %v1118
    %v1150 = vmul.f32 %v667, %v1122
    %v1151 = vmul.f32 %v668, %v1118
    %v1152 = vmul.f32 %v669, %v1122
    %v1153 = vmul.f32 %v670, %v1118
    %v1154 = vmul.f32 %v671, %v1122
    %v1155 = vmul.f32 %v672, %v1118
    %v1156 = vmul.f32 %v673, %v1122
    %v1157 = vmul.f32 %v674, %v1118
    %v1158 = vmul.f32 %v675, %v1122
    %1159 = vst [vmem:[#allocation7] sm:$0xff] %v1127
    %1160 = vst [vmem:[#allocation7 + $0x8] sm:$0xff] %v1128
    %1161 = vst [vmem:[#allocation7 + $0x10] sm:$0xff] %v1129
    %1162 = vst [vmem:[#allocation7 + $0x18] sm:$0xff] %v1130
    %1163 = vst [vmem:[#allocation7 + $0x20] sm:$0xff] %v1131
    %1164 = vst [vmem:[#allocation7 + $0x28] sm:$0xff] %v1132
    %1165 = vst [vmem:[#allocation7 + $0x30] sm:$0xff] %v1133
    %1166 = vst [vmem:[#allocation7 + $0x38] sm:$0xff] %v1134
    %1167 = vst [vmem:[#allocation7 + $0x40] sm:$0xff] %v1135
    %1168 = vst [vmem:[#allocation7 + $0x48] sm:$0xff] %v1136
    %1169 = vst [vmem:[#allocation7 + $0x50] sm:$0xff] %v1137
    %1170 = vst [vmem:[#allocation7 + $0x58] sm:$0xff] %v1138
    %1171 = vst [vmem:[#allocation7 + $0x60] sm:$0xff] %v1139
    %1172 = vst [vmem:[#allocation7 + $0x68] sm:$0xff] %v1140
    %1173 = vst [vmem:[#allocation7 + $0x70] sm:$0xff] %v1141
    %1174 = vst [vmem:[#allocation7 + $0x78] sm:$0xff] %v1142
    %1175 = vst [vmem:[#allocation7 + $0x80] sm:$0xff] %v1143
    %1176 = vst [vmem:[#allocation7 + $0x88] sm:$0xff] %v1144
    %1177 = vst [vmem:[#allocation7 + $0x90] sm:$0xff] %v1145
    %1178 = vst [vmem:[#allocation7 + $0x98] sm:$0xff] %v1146
    %1179 = vst [vmem:[#allocation7 + $0xa0] sm:$0xff] %v1147
    %1180 = vst [vmem:[#allocation7 + $0xa8] sm:$0xff] %v1148
    %1181 = vst [vmem:[#allocation7 + $0xb0] sm:$0xff] %v1149
    %1182 = vst [vmem:[#allocation7 + $0xb8] sm:$0xff] %v1150
    %1183 = vst [vmem:[#allocation7 + $0xc0] sm:$0xff] %v1151
    %1184 = vst [vmem:[#allocation7 + $0xc8] sm:$0xff] %v1152
    %1185 = vst [vmem:[#allocation7 + $0xd0] sm:$0xff] %v1153
    %1186 = vst [vmem:[#allocation7 + $0xd8] sm:$0xff] %v1154
    %1187 = vst [vmem:[#allocation7 + $0xe0] sm:$0xff] %v1155
    %1188 = vst [vmem:[#allocation7 + $0xe8] sm:$0xff] %v1156
    %1189 = vst [vmem:[#allocation7 + $0xf0] sm:$0xff] %v1157
    %1190 = vst [vmem:[#allocation7 + $0xf8] sm:$0xff] %v1158
    // Predicated region
    $region26: #{tpu_custom_call.1} parent=1 // pred_check
      _
    $region27: #{tpu_custom_call.1} parent=1 // pred_check_branch
      %1192 = sbr.rel (0) target = $region29
    $region28: #{tpu_custom_call.1} parent=1 // pred_region
      %s1194 = ssub.s32 4096, 4096
      %1195 = vsyncadd [#allocation4], %s1194
      %s1196 = sshll.u32 [#allocation7], 4
      %s1197 = int_to_ptr.vmem [resolvable:$true] %s1196
      %1202 = dma.vmem_to_hbm [thread:$0]  %s1197, 4096, %s4, [#allocation4], 256, 256, 16
    $region29: #{tpu_custom_call.1} parent=1 // pred_fallthru
      _
    // Predicated region
    $region30: #{tpu_custom_call.1} parent=1 // pred_check
      _
    $region31: #{tpu_custom_call.1} parent=1 // pred_check_branch
      %1204 = sbr.rel (0) target = $region33
    $region32: #{tpu_custom_call.1} parent=1 // pred_region
      %1205 = dma.done [#allocation4], 4096
    $region33: #{tpu_custom_call.1} parent=1 // pred_fallthru
      _
    %1206 = vsyncpa [#allocation3], 1
    %1207 = vsyncpa [#allocation6], 1
    %1208 = vsyncpa [#allocation4], 1

</llo_original>
